<compile_context>
chip_gen: v7x
topology: tpu7x:2x2x1
jax: 0.10.0
libtpu: 0.0.40
codegen_flags: <defaults>
</compile_context>

<pallas_src>
import jax
import jax.numpy as jnp
import numpy as np
from jax.experimental import pallas as pl
from jax.experimental.pallas import tpu as pltpu

# ---------------- sizes (small, consistent with the module's __init__) ----------------
B = 8             # batch (demo)
NUM_FEAT = 16     # nume_input_size (GBDT2NN numeric features)
G = 4             # number of tree groups
F = 8             # used features per group
H = 16            # tree_layers hidden size
E = 8             # leaf-embedding size per group (output_w has G*E rows)
CATE_FIELDS = 4   # cate_field_size (DeepFM)
FEAT_SIZE = 10    # vocab size per categorical field
VOCAB = CATE_FIELDS * FEAT_SIZE
K = 4             # embedding_size (DeepFM)
D1, D2 = 32, 32   # deep_layers

GH = G * H            # 64
GE = G * E            # 32
N1 = GH + (K + 1) + D1    # 101  (stage-1 output width)
N2 = GE + 1 + D2          # 65   (stage-2 output width)
IN1 = NUM_FEAT + VOCAB    # 56   (stage-1 input width)
IN2 = GH + D1             # 96   (stage-2 input width)


# ------------------------------------ Pallas kernel ------------------------------------
def deepgbm_kernel(xg_ref, idx_ref, scal_ref,
                   ws1_ref, bs1_ref, ws2_ref, bs2_ref,
                   out_ref):
    tb = xg_ref.shape[0]
    beta = scal_ref[0]        # SMEM scalar
    fm_bias = scal_ref[1]     # SMEM scalar

    # ---- multi-hot over the concatenated vocab (global ids precomputed in wrapper) ----
    iota_v = jax.lax.broadcasted_iota(jnp.int32, (tb, VOCAB), 1)
    m = (iota_v == idx_ref[:, 0:1]).astype(jnp.float32)
    for fc in range(1, CATE_FIELDS):                      # static unroll, Fc = 4
        m = m + (iota_v == idx_ref[:, fc:fc + 1]).astype(jnp.float32)

    # ---- stage 1: one block-diagonal matmul for tree layer-1, FM stats, deep layer-1 ----
    x1 = jnp.concatenate([xg_ref[...].astype(jnp.float32), m], axis=1)        # (tb, 56)
    pre1 = jnp.dot(x1, ws1_ref[...], preferred_element_type=jnp.float32) + bs1_ref[...]
    h = jnp.maximum(pre1[:, :GH], 0.0)                                        # (tb, 64)
    stats = pre1[:, GH:GH + K + 1]                                            # (tb, 5)
    d1 = jnp.maximum(pre1[:, GH + K + 1:], 0.0)                               # (tb, 32)

    # FM: col K of stats = first_order - 0.5*sum(sec^2); cols 0..K-1 = sum_emb
    sum_emb = stats[:, :K]
    fm_part = stats[:, K:K + 1] + 0.5 * jnp.sum(sum_emb * sum_emb, axis=1, keepdims=True)

    # ---- stage 2: one block-diagonal matmul for tree layer-2 (+folded outw) & deep layer-2 ----
    x2 = jnp.concatenate([h, d1], axis=1)                                     # (tb, 96)
    pre2 = jnp.dot(x2, ws2_ref[...], preferred_element_type=jnp.float32) + bs2_ref[...]
    emb = pre2[:, :GE]                                                        # (tb, 32)
    gbdt_scaled = pre2[:, GE:GE + 1]            # already (alpha+1)*gbdt_pred (bias folded)
    d2 = jnp.maximum(pre2[:, GE + 1:], 0.0)                                   # (tb, 32)

    deepfm_out = fm_part + jnp.sum(d2, axis=1, keepdims=True) + fm_bias       # (tb, 1)
    out_col = gbdt_scaled + beta * deepfm_out                                 # (tb, 1)

    # single lane-dense output slab: [leaf-embedding pred | ensemble output]
    out_ref[...] = jnp.concatenate([emb, out_col], axis=1)                    # (tb, 33)


# ------------------------------------ wrapper (glue) ------------------------------------
def deepgbm_forward(Xg, Xd, fp, tb=1024, xg_dtype=jnp.float32):
    """tb: batch tile (amortizes ~0.35us/step grid overhead; VMEM use is a few MB even at 4096).
       xg_dtype: set to jnp.bfloat16 to halve the dominant HBM read at production batch."""
    Bv = Xg.shape[0]

    Xd_g = Xd.astype(jnp.int32) + fp['field_offsets'][None, :]   # global vocab ids (B, Fc)
    Xg = Xg.astype(xg_dtype)

    # --- batch tiling: sublane-align, pad the tail, prefer >=2 grid steps (v7x: 2 TCs) ---
    Bp = ((Bv + 7) // 8) * 8
    tbe = min(((tb + 7) // 8) * 8, Bp)
    if Bp // tbe <= 1 and Bp >= 16:
        tbe = ((Bp // 2 + 7) // 8) * 8          # split batch so both v7x cores get work
    Bp = pl.cdiv(Bp, tbe) * tbe
    if Bp != Bv:
        Xg = jnp.pad(Xg, ((0, Bp - Bv), (0, 0)))
        Xd_g = jnp.pad(Xd_g, ((0, Bp - Bv), (0, 0)))
    grid = (Bp // tbe,)

    scal = jnp.array([fp['beta'], fp['fm_bias']], jnp.float32)   # SMEM scalars

    row = lambda i: (i, 0)   # batch-tiled activations / outputs
    rep = lambda i: (0, 0)   # weights: same block every step (stay VMEM-resident)

    slab = pl.pallas_call(
        deepgbm_kernel,
        out_shape=jax.ShapeDtypeStruct((Bp, GE + 1), jnp.float32),
        grid=grid,
        in_specs=[
            pl.BlockSpec((tbe, NUM_FEAT), row),                       # Xg
            pl.BlockSpec((tbe, CATE_FIELDS), row),                    # global vocab ids
            pl.BlockSpec(memory_space=pltpu.MemorySpace.SMEM),        # beta, fm_bias
            pl.BlockSpec((IN1, N1), rep),                             # stage-1 block-diag W
            pl.BlockSpec((1, N1), rep),                               # stage-1 bias
            pl.BlockSpec((IN2, N2), rep),                             # stage-2 block-diag W
            pl.BlockSpec((1, N2), rep),                               # stage-2 bias
        ],
        out_specs=pl.BlockSpec((tbe, GE + 1), row),
        compiler_params=pltpu.CompilerParams(dimension_semantics=("parallel",)),
    )(Xg, Xd_g, scal, fp['ws1'], fp['bs1'], fp['ws2'], fp['bs2'])

    out = slab[:Bv, GE]        # (B,)  like torch .view(-1)
    emb = slab[:Bv, :GE]       # (B, G*E) gbdt2nn_pred
    return out, emb


# -------------------- original (module-shaped) parameters --------------------
def init_params(key):
    ks = jax.random.split(key, 11)
    s = 0.1
    used_features = (np.arange(F)[None, :] + 3 * np.arange(G)[:, None]) % NUM_FEAT
    return dict(
        used_features=jnp.asarray(used_features, jnp.int32),            # (G, F)
        w1=s * jax.random.normal(ks[0], (G, F, H), jnp.float32),
        b1=s * jax.random.normal(ks[1], (G, 1, H), jnp.float32),
        w2=s * jax.random.normal(ks[2], (G, H, E), jnp.float32),
        b2=s * jax.random.normal(ks[3], (G, 1, E), jnp.float32),
        outw=s * jax.random.normal(ks[4], (G, 1, E), jnp.float32),      # output_w
        gbdt_out_b=0.05,                                                # output_b
        emb_first=s * jax.random.normal(ks[5], (VOCAB, 1), jnp.float32),
        emb_second=s * jax.random.normal(ks[6], (VOCAB, K), jnp.float32),
        field_offsets=jnp.arange(CATE_FIELDS, dtype=jnp.int32) * FEAT_SIZE,
        dw1=s * jax.random.normal(ks[7], (CATE_FIELDS * K, D1), jnp.float32),
        db1=s * jax.random.normal(ks[8], (1, D1), jnp.float32),
        dw2=s * jax.random.normal(ks[9], (D1, D2), jnp.float32),
        db2=s * jax.random.normal(ks[10], (1, D2), jnp.float32),
        fm_bias=0.1,
        # nn.Parameter scalars; non-zero (as after training) so BOTH branches of
        # out = (alpha+1)*gbdt + beta*deepfm are exercised by the numerical check.
        alpha=0.3,
        beta=0.7,
    )


# ------------- one-time parameter fusion (done at init time, not per call) -------------
def prepare_fused_params(p):
    uf = np.asarray(p['used_features'])
    w1 = np.asarray(p['w1']); b1 = np.asarray(p['b1'])
    w2 = np.asarray(p['w2']); b2 = np.asarray(p['b2'])
    outw = np.asarray(p['outw'])
    emb1 = np.asarray(p['emb_first']); emb2 = np.asarray(p['emb_second'])
    dw1 = np.asarray(p['dw1']); db1 = np.asarray(p['db1'])
    dw2 = np.asarray(p['dw2']); db2 = np.asarray(p['db2'])
    alpha1 = float(p['alpha']) + 1.0

    # fold the static used_features gather into a (NUM_FEAT, G*H) matrix
    w1_eff = np.zeros((NUM_FEAT, GH), np.float32)
    for g in range(G):
        for f in range(F):
            w1_eff[uf[g, f], g * H:(g + 1) * H] += w1[g, f, :]

    # block-diagonal second tree layer (G*H, G*E)
    w2_bd = np.zeros((GH, GE), np.float32)
    for g in range(G):
        w2_bd[g * H:(g + 1) * H, g * E:(g + 1) * E] = w2[g]
    outw_flat = outw.reshape(GE, 1)
    b1_flat = b1.reshape(1, GH)
    b2_flat = b2.reshape(1, GE)

    # field-selection matrix (one-hot row -> concatenated deep embedding), folded with dw1
    w_sel = np.zeros((VOCAB, CATE_FIELDS * K), np.float32)
    for fc in range(CATE_FIELDS):
        w_sel[fc * FEAT_SIZE:(fc + 1) * FEAT_SIZE, fc * K:(fc + 1) * K] = \
            emb2[fc * FEAT_SIZE:(fc + 1) * FEAT_SIZE, :]
    wd1_eff = (w_sel @ dw1).astype(np.float32)                          # (VOCAB, D1)

    # FM stats table: cols 0..K-1 = emb_second ; col K = emb_first - 0.5*rowsum(emb_second^2)
    sq_rowsum = np.sum(emb2 ** 2, axis=1, keepdims=True)
    w_stats = np.concatenate([emb2, emb1 - 0.5 * sq_rowsum], axis=1).astype(np.float32)

    # ---- stage-1 block-diagonal RHS: [xg | m] @ ws1 -> [h_pre | stats | d1_pre] ----
    ws1 = np.zeros((IN1, N1), np.float32)
    ws1[:NUM_FEAT, :GH] = w1_eff
    ws1[NUM_FEAT:, GH:GH + K + 1] = w_stats
    ws1[NUM_FEAT:, GH + K + 1:] = wd1_eff
    bs1 = np.zeros((1, N1), np.float32)
    bs1[:, :GH] = b1_flat
    bs1[:, GH + K + 1:] = db1

    # ---- stage-2 block-diagonal RHS: [relu(h) | relu(d1)] @ ws2
    #      -> [emb | (alpha+1)*gbdt_pred | d2_pre]   (outw, output_b, alpha+1 folded in) ----
    ws2 = np.zeros((IN2, N2), np.float32)
    ws2[:GH, :GE] = w2_bd
    ws2[:GH, GE:GE + 1] = alpha1 * (w2_bd @ outw_flat)
    ws2[GH:, GE + 1:] = dw2
    bs2 = np.zeros((1, N2), np.float32)
    bs2[:, :GE] = b2_flat
    bs2[:, GE] = alpha1 * (float((b2_flat @ outw_flat)[0, 0]) + float(p['gbdt_out_b']))
    bs2[:, GE + 1:] = db2

    return dict(
        ws1=jnp.asarray(ws1), bs1=jnp.asarray(bs1),
        ws2=jnp.asarray(ws2), bs2=jnp.asarray(bs2),
        field_offsets=p['field_offsets'],
        beta=float(p['beta']), fm_bias=float(p['fm_bias']),
    )


# ---------------------------------- pure-JAX reference ----------------------------------
def deepgbm_reference(Xg, Xd, p):
    Bv = Xg.shape[0]
    xg_sel = jnp.transpose(Xg[:, p['used_features']], (1, 0, 2))
    h = jnp.maximum(jnp.einsum('gbf,gfh->gbh', xg_sel, p['w1']) + p['b1'], 0.0)
    emb = jnp.einsum('gbh,ghe->gbe', h, p['w2']) + p['b2']
    gbdt_pred = jnp.sum(emb * p['outw'], axis=(0, 2)) + p['gbdt_out_b']
    idx = Xd.astype(jnp.int32) + p['field_offsets'][None, :]
    first = p['emb_first'][idx, 0]
    sec = p['emb_second'][idx]
    sum_emb = jnp.sum(sec, axis=1)
    fm2 = 0.5 * (sum_emb ** 2 - jnp.sum(sec ** 2, axis=1))
    d = jnp.maximum(sec.reshape(Bv, -1) @ p['dw1'] + p['db1'], 0.0)
    d = jnp.maximum(d @ p['dw2'] + p['db2'], 0.0)
    dfm = first.sum(1) + fm2.sum(1) + d.sum(1) + p['fm_bias']
    out = (p['alpha'] + 1.0) * gbdt_pred + p['beta'] * dfm
    gbdt_emb = jnp.transpose(emb, (1, 0, 2)).reshape(Bv, G * E)
    return out, gbdt_emb


if __name__ == "__main__":
    key = jax.random.PRNGKey(0)
    kp, kx, kd = jax.random.split(key, 3)
    params = init_params(kp)
    fused = prepare_fused_params(params)

    Xg = jax.random.normal(kx, (B, NUM_FEAT), jnp.float32)
    Xd = jax.random.randint(kd, (B, CATE_FIELDS), 0, FEAT_SIZE, dtype=jnp.int32)

    out, emb_pred = deepgbm_forward(Xg, Xd, fused)
    jax.block_until_ready((out, emb_pred))

    ref_out, ref_emb = deepgbm_reference(Xg, Xd, params)
    np.testing.assert_allclose(np.asarray(out), np.asarray(ref_out), rtol=2e-3, atol=2e-3)
    np.testing.assert_allclose(np.asarray(emb_pred), np.asarray(ref_emb), rtol=2e-3, atol=2e-3)

    print("KERNEL_OK")
</pallas_src>

<mosaic_0001>
module attributes {stable_mosaic.version = 11 : i64} {
  func.func @deepgbm_kernel(%arg0: i32, %arg1: memref<8x16xf32, #tpu.memory_space<vmem>>, %arg2: memref<8x4xi32, #tpu.memory_space<vmem>>, %arg3: memref<2xf32, #tpu.memory_space<smem>>, %arg4: memref<56x101xf32, #tpu.memory_space<vmem>>, %arg5: memref<1x101xf32, #tpu.memory_space<vmem>>, %arg6: memref<96x65xf32, #tpu.memory_space<vmem>>, %arg7: memref<1x65xf32, #tpu.memory_space<vmem>>, %arg8: memref<8x33xf32, #tpu.memory_space<vmem>>) attributes {dimension_semantics = [#tpu.dimension_semantics<parallel>], iteration_bounds = array<i64: 1>, scalar_prefetch = 0 : i64, scratch_operands = 0 : i64, tpu.core_type = #tpu.core_type<tc>, window_params = [{transform_indices = @transform_0, window_bounds = array<i64: 8, 16>}, {transform_indices = @transform_1, window_bounds = array<i64: 8, 4>}, {transform_indices = @transform_2, window_bounds = array<i64: 2>}, {pipeline_mode = #tpu.pipeline_mode<synchronous>, transform_indices = @transform_3, window_bounds = array<i64: 56, 101>}, {pipeline_mode = #tpu.pipeline_mode<synchronous>, transform_indices = @transform_4, window_bounds = array<i64: 1, 101>}, {pipeline_mode = #tpu.pipeline_mode<synchronous>, transform_indices = @transform_5, window_bounds = array<i64: 96, 65>}, {pipeline_mode = #tpu.pipeline_mode<synchronous>, transform_indices = @transform_6, window_bounds = array<i64: 1, 65>}, {transform_indices = @transform_7, window_bounds = array<i64: 8, 33>}]} {
    %c0 = arith.constant 0 : index
    %0 = memref.load %arg3[%c0] : memref<2xf32, #tpu.memory_space<smem>>
    %c1 = arith.constant 1 : index
    %1 = memref.load %arg3[%c1] : memref<2xf32, #tpu.memory_space<smem>>
    %2 = tpu.iota {dimensions = array<i32: 1>} : vector<8x40xi32>
    %c0_0 = arith.constant 0 : index
    %c0_1 = arith.constant 0 : index
    %3 = vector.load %arg2[%c0_0, %c0_1] : memref<8x4xi32, #tpu.memory_space<vmem>>, vector<8x1xi32>
    %4 = vector.broadcast %3 : vector<8x1xi32> to vector<8x40xi32>
    %5 = arith.cmpi eq, %2, %4 : vector<8x40xi32>
    %6 = arith.extui %5 : vector<8x40xi1> to vector<8x40xi32>
    %7 = arith.sitofp %6 : vector<8x40xi32> to vector<8x40xf32>
    %c0_2 = arith.constant 0 : index
    %c1_3 = arith.constant 1 : index
    %8 = vector.load %arg2[%c0_2, %c1_3] : memref<8x4xi32, #tpu.memory_space<vmem>>, vector<8x1xi32>
    %9 = vector.broadcast %8 : vector<8x1xi32> to vector<8x40xi32>
    %10 = arith.cmpi eq, %2, %9 : vector<8x40xi32>
    %11 = arith.extui %10 : vector<8x40xi1> to vector<8x40xi32>
    %12 = arith.sitofp %11 : vector<8x40xi32> to vector<8x40xf32>
    %13 = arith.addf %7, %12 : vector<8x40xf32>
    %c0_4 = arith.constant 0 : index
    %c2 = arith.constant 2 : index
    %14 = vector.load %arg2[%c0_4, %c2] : memref<8x4xi32, #tpu.memory_space<vmem>>, vector<8x1xi32>
    %15 = vector.broadcast %14 : vector<8x1xi32> to vector<8x40xi32>
    %16 = arith.cmpi eq, %2, %15 : vector<8x40xi32>
    %17 = arith.extui %16 : vector<8x40xi1> to vector<8x40xi32>
    %18 = arith.sitofp %17 : vector<8x40xi32> to vector<8x40xf32>
    %19 = arith.addf %13, %18 : vector<8x40xf32>
    %c0_5 = arith.constant 0 : index
    %c3 = arith.constant 3 : index
    %20 = vector.load %arg2[%c0_5, %c3] : memref<8x4xi32, #tpu.memory_space<vmem>>, vector<8x1xi32>
    %21 = vector.broadcast %20 : vector<8x1xi32> to vector<8x40xi32>
    %22 = arith.cmpi eq, %2, %21 : vector<8x40xi32>
    %23 = arith.extui %22 : vector<8x40xi1> to vector<8x40xi32>
    %24 = arith.sitofp %23 : vector<8x40xi32> to vector<8x40xf32>
    %25 = arith.addf %19, %24 : vector<8x40xf32>
    %c0_6 = arith.constant 0 : index
    %c0_7 = arith.constant 0 : index
    %26 = vector.load %arg1[%c0_6, %c0_7] : memref<8x16xf32, #tpu.memory_space<vmem>>, vector<8x16xf32>
    %27 = tpu.concatenate %26, %25 in 1 : vector<8x16xf32>, vector<8x40xf32> -> vector<8x56xf32>
    %c0_8 = arith.constant 0 : index
    %c0_9 = arith.constant 0 : index
    %28 = vector.load %arg4[%c0_8, %c0_9] : memref<56x101xf32, #tpu.memory_space<vmem>>, vector<56x101xf32>
    %cst = arith.constant dense<0.000000e+00> : vector<8x101xf32>
    %29 = tpu.matmul %27, %28, %cst {dimension_numbers = #tpu.dot_dimension_numbers<[1], [0], [0], [1], [0, 0, 1, 1], [], []>} : vector<8x56xf32>, vector<56x101xf32>, vector<8x101xf32> -> vector<8x101xf32>
    %c0_10 = arith.constant 0 : index
    %c0_11 = arith.constant 0 : index
    %30 = vector.load %arg5[%c0_10, %c0_11] : memref<1x101xf32, #tpu.memory_space<vmem>>, vector<1x101xf32>
    %31 = vector.broadcast %30 : vector<1x101xf32> to vector<8x101xf32>
    %32 = arith.addf %29, %31 : vector<8x101xf32>
    %33 = vector.extract_strided_slice %32 {offsets = [0, 0], sizes = [8, 64], strides = [1, 1]} : vector<8x101xf32> to vector<8x64xf32>
    %cst_12 = arith.constant 0.000000e+00 : f32
    %34 = vector.broadcast %cst_12 : f32 to vector<8x64xf32>
    %35 = arith.maximumf %33, %34 : vector<8x64xf32>
    %36 = vector.extract_strided_slice %32 {offsets = [0, 64], sizes = [8, 5], strides = [1, 1]} : vector<8x101xf32> to vector<8x5xf32>
    %37 = vector.extract_strided_slice %32 {offsets = [0, 69], sizes = [8, 32], strides = [1, 1]} : vector<8x101xf32> to vector<8x32xf32>
    %cst_13 = arith.constant 0.000000e+00 : f32
    %38 = vector.broadcast %cst_13 : f32 to vector<8x32xf32>
    %39 = arith.maximumf %37, %38 : vector<8x32xf32>
    %40 = vector.extract_strided_slice %36 {offsets = [0, 0], sizes = [8, 4], strides = [1, 1]} : vector<8x5xf32> to vector<8x4xf32>
    %41 = vector.extract_strided_slice %36 {offsets = [0, 4], sizes = [8, 1], strides = [1, 1]} : vector<8x5xf32> to vector<8x1xf32>
    %42 = arith.mulf %40, %40 : vector<8x4xf32>
    %cst_14 = arith.constant dense<0.000000e+00> : vector<8xf32>
    %43 = vector.multi_reduction <add>, %42, %cst_14 [1] : vector<8x4xf32> to vector<8xf32>
    %44 = vector.shape_cast %43 : vector<8xf32> to vector<8x1xf32>
    %cst_15 = arith.constant 5.000000e-01 : f32
    %45 = vector.broadcast %cst_15 : f32 to vector<8x1xf32>
    %46 = arith.mulf %45, %44 : vector<8x1xf32>
    %47 = arith.addf %41, %46 : vector<8x1xf32>
    %48 = tpu.concatenate %35, %39 in 1 : vector<8x64xf32>, vector<8x32xf32> -> vector<8x96xf32>
    %c0_16 = arith.constant 0 : index
    %c0_17 = arith.constant 0 : index
    %49 = vector.load %arg6[%c0_16, %c0_17] : memref<96x65xf32, #tpu.memory_space<vmem>>, vector<96x65xf32>
    %cst_18 = arith.constant dense<0.000000e+00> : vector<8x65xf32>
    %50 = tpu.matmul %48, %49, %cst_18 {dimension_numbers = #tpu.dot_dimension_numbers<[1], [0], [0], [1], [0, 0, 1, 1], [], []>} : vector<8x96xf32>, vector<96x65xf32>, vector<8x65xf32> -> vector<8x65xf32>
    %c0_19 = arith.constant 0 : index
    %c0_20 = arith.constant 0 : index
    %51 = vector.load %arg7[%c0_19, %c0_20] : memref<1x65xf32, #tpu.memory_space<vmem>>, vector<1x65xf32>
    %52 = vector.broadcast %51 : vector<1x65xf32> to vector<8x65xf32>
    %53 = arith.addf %50, %52 : vector<8x65xf32>
    %54 = vector.extract_strided_slice %53 {offsets = [0, 0], sizes = [8, 32], strides = [1, 1]} : vector<8x65xf32> to vector<8x32xf32>
    %55 = vector.extract_strided_slice %53 {offsets = [0, 32], sizes = [8, 1], strides = [1, 1]} : vector<8x65xf32> to vector<8x1xf32>
    %56 = vector.extract_strided_slice %53 {offsets = [0, 33], sizes = [8, 32], strides = [1, 1]} : vector<8x65xf32> to vector<8x32xf32>
    %cst_21 = arith.constant 0.000000e+00 : f32
    %57 = vector.broadcast %cst_21 : f32 to vector<8x32xf32>
    %58 = arith.maximumf %56, %57 : vector<8x32xf32>
    %cst_22 = arith.constant dense<0.000000e+00> : vector<8xf32>
    %59 = vector.multi_reduction <add>, %58, %cst_22 [1] : vector<8x32xf32> to vector<8xf32>
    %60 = vector.shape_cast %59 : vector<8xf32> to vector<8x1xf32>
    %61 = arith.addf %47, %60 : vector<8x1xf32>
    %62 = vector.broadcast %1 : f32 to vector<8x1xf32>
    %63 = arith.addf %61, %62 : vector<8x1xf32>
    %64 = vector.broadcast %0 : f32 to vector<8x1xf32>
    %65 = arith.mulf %64, %63 : vector<8x1xf32>
    %66 = arith.addf %55, %65 : vector<8x1xf32>
    %67 = tpu.concatenate %54, %66 in 1 : vector<8x32xf32>, vector<8x1xf32> -> vector<8x33xf32>
    %c0_23 = arith.constant 0 : index
    %c0_24 = arith.constant 0 : index
    %68 = vector.load %arg8[%c0_23, %c0_24] : memref<8x33xf32, #tpu.memory_space<vmem>>, vector<8x33xf32>
    tpu.vector_store %arg8[%c0_23, %c0_24], %67 {strides = array<i32>} : memref<8x33xf32, #tpu.memory_space<vmem>>, vector<8x33xf32>,
    return
  }
  func.func @transform_0(%arg0: i32) -> (i32, i32) {
    %c0_i32 = arith.constant 0 : i32
    %c0_i32_0 = arith.constant 0 : i32
    return %arg0, %c0_i32 : i32, i32
  }
  func.func @transform_1(%arg0: i32) -> (i32, i32) {
    %c0_i32 = arith.constant 0 : i32
    %c0_i32_0 = arith.constant 0 : i32
    return %arg0, %c0_i32 : i32, i32
  }
  func.func @transform_2(%arg0: i32) -> i32 {
    %c0_i32 = arith.constant 0 : i32
    %c0_i32_0 = arith.constant 0 : i32
    return %c0_i32 : i32
  }
  func.func @transform_3(%arg0: i32) -> (i32, i32) {
    %c0_i32 = arith.constant 0 : i32
    %c0_i32_0 = arith.constant 0 : i32
    %c0_i32_1 = arith.constant 0 : i32
    return %c0_i32, %c0_i32_0 : i32, i32
  }
  func.func @transform_4(%arg0: i32) -> (i32, i32) {
    %c0_i32 = arith.constant 0 : i32
    %c0_i32_0 = arith.constant 0 : i32
    %c0_i32_1 = arith.constant 0 : i32
    return %c0_i32, %c0_i32_0 : i32, i32
  }
  func.func @transform_5(%arg0: i32) -> (i32, i32) {
    %c0_i32 = arith.constant 0 : i32
    %c0_i32_0 = arith.constant 0 : i32
    %c0_i32_1 = arith.constant 0 : i32
    return %c0_i32, %c0_i32_0 : i32, i32
  }
  func.func @transform_6(%arg0: i32) -> (i32, i32) {
    %c0_i32 = arith.constant 0 : i32
    %c0_i32_0 = arith.constant 0 : i32
    %c0_i32_1 = arith.constant 0 : i32
    return %c0_i32, %c0_i32_0 : i32, i32
  }
  func.func @transform_7(%arg0: i32) -> (i32, i32) {
    %c0_i32 = arith.constant 0 : i32
    %c0_i32_0 = arith.constant 0 : i32
    return %arg0, %c0_i32 : i32, i32
  }
}

</mosaic_0001>

<llo_original>
// kernel: tpu_custom_call.1
$region0: #{tpu_custom_call.1}
  #allocation0 [shape = 'u32[]', space=smem, size = 0x4, offset = 0x4, fixed_abs, tag = 'smem constant byte address 0x4 - core index']
  #allocation1 [shape = 'u32[144,128]{1,0:T(1,128)}', space=vmem, size = 0x12000, scoped, tag = 'internal scratch']
  %s0 = inlined_call_operand.vmem [shape: f32[8,16], index: 0, kind: input, shape index: {}]
  %s1 = inlined_call_operand.vmem [shape: s32[8,4], index: 1, kind: input, shape index: {}]
  %s2 = inlined_call_operand.vmem [shape: f32[2], index: 2, kind: input, shape index: {}]
  %s3 = inlined_call_operand.vmem [shape: f32[56,101], index: 3, kind: input, shape index: {}]
  %s4 = inlined_call_operand.vmem [shape: f32[1,101], index: 4, kind: input, shape index: {}]
  %s5 = inlined_call_operand.vmem [shape: f32[96,65], index: 5, kind: input, shape index: {}]
  %s6 = inlined_call_operand.vmem [shape: f32[1,65], index: 6, kind: input, shape index: {}]
  %s7 = inlined_call_operand.hbm [shape: f32[8,33], index: 7, kind: output, shape index: {}]
  %s8 = sld [smem:[#allocation0]]
  $region42: #{tpu_custom_call.1} parent=0
    _
  %s10 = ssub.s32 1, %s8
  %s11 = scalar_select 0, %s10, %s8
  $region1: #{tpu_custom_call.1} parent=0
    #allocation2 [shape = 'u8[512]{0}', space=smem, size = 0x200, scoped, tag = 'input window, operand 2, single buffered']
    #allocation3 [shape = 's32[1]{0}', space=sflag, size = 0x4, scoped, tag = 'scoped memory for tpu_custom_call.1']
    #allocation4 [shape = 's32[1]{0}', space=sflag, size = 0x4, scoped, tag = 'scoped memory for tpu_custom_call.1']
    #allocation5 [shape = 'u8[4096]{0}', space=vmem, size = 0x1000, scoped, tag = 'output window, operand 0, single buffered']
    %12 = vsyncpa [#allocation4], 0
    %13 = vsyncpa [#allocation3], 0
    // Predicated region
    $region2: #{tpu_custom_call.1} parent=1 // pred_check
      _
    $region3: #{tpu_custom_call.1} parent=1 // pred_check_branch
      %15 = sbr.rel (0) target = $region5
    $region4: #{tpu_custom_call.1} parent=1 // pred_region
      _
    $region5: #{tpu_custom_call.1} parent=1 // pred_fallthru
      _
    // Predicated region
    $region6: #{tpu_custom_call.1} parent=1 // pred_check
      _
    $region7: #{tpu_custom_call.1} parent=1 // pred_check_branch
      %17 = sbr.rel (0) target = $region9
    $region8: #{tpu_custom_call.1} parent=1 // pred_region
      _
    $region9: #{tpu_custom_call.1} parent=1 // pred_fallthru
      _
    // Predicated region
    $region10: #{tpu_custom_call.1} parent=1 // pred_check
      _
    $region11: #{tpu_custom_call.1} parent=1 // pred_check_branch
      %19 = sbr.rel (0) target = $region13
    $region12: #{tpu_custom_call.1} parent=1 // pred_region
      %s21 = ssub.s32 16, 16
      %22 = vsyncadd [#allocation4], %s21
      %s24 = sshll.u32 %s2, 4
      %s25 = int_to_ptr.vmem [resolvable:$true] %s24
      %27 = dma.vmem_to_smem %s25, 16, [#allocation2], [#allocation4]
    $region13: #{tpu_custom_call.1} parent=1 // pred_fallthru
      _
    // Predicated region
    $region14: #{tpu_custom_call.1} parent=1 // pred_check
      _
    $region15: #{tpu_custom_call.1} parent=1 // pred_check_branch
      %29 = sbr.rel (0) target = $region17
    $region16: #{tpu_custom_call.1} parent=1 // pred_region
      _
    $region17: #{tpu_custom_call.1} parent=1 // pred_fallthru
      _
    // Predicated region
    $region18: #{tpu_custom_call.1} parent=1 // pred_check
      _
    $region19: #{tpu_custom_call.1} parent=1 // pred_check_branch
      %31 = sbr.rel (0) target = $region21
    $region20: #{tpu_custom_call.1} parent=1 // pred_region
      _
    $region21: #{tpu_custom_call.1} parent=1 // pred_fallthru
      _
    // Predicated region
    $region22: #{tpu_custom_call.1} parent=1 // pred_check
      _
    $region23: #{tpu_custom_call.1} parent=1 // pred_check_branch
      %33 = sbr.rel (0) target = $region25
    $region24: #{tpu_custom_call.1} parent=1 // pred_region
      _
    $region25: #{tpu_custom_call.1} parent=1 // pred_fallthru
      _
    // Predicated region
    $region26: #{tpu_custom_call.1} parent=1 // pred_check
      _
    $region27: #{tpu_custom_call.1} parent=1 // pred_check_branch
      %35 = sbr.rel (0) target = $region29
    $region28: #{tpu_custom_call.1} parent=1 // pred_region
      _
    $region29: #{tpu_custom_call.1} parent=1 // pred_fallthru
      _
    // Predicated region
    $region30: #{tpu_custom_call.1} parent=1 // pred_check
      _
    $region31: #{tpu_custom_call.1} parent=1 // pred_check_branch
      %37 = sbr.rel (0) target = $region33
    $region32: #{tpu_custom_call.1} parent=1 // pred_region
      %38 = dma.done [#allocation4], 16
    $region33: #{tpu_custom_call.1} parent=1 // pred_fallthru
      _
    %39 = sfence
    %s40 = sld [smem:[#allocation2]]
    %s41 = sld [smem:[#allocation2 + $0x1]]
    %v42 = vlaneseq
    %v43 = vand.u32 %v42, 127
    %v44 = vld [vmem:[%s1] sm:$0xff]
    %45 = vset.pattern.permute.xlu0 0
    %46 = vperm.xlu0 %45, %v44
    %v47 = vpop.permute.xlu0 %46
    %vm48 = vcmp.eq.s32.totalorder %v43, %v47
    %v49 = vsel %vm48, 1, 0
    %v50 = vcvt.s32.f32 %v49
    %51 = vset.pattern.permute.xlu0 1
    %52 = vperm.xlu0 %51, %v44
    %v53 = vpop.permute.xlu0 %52
    %vm54 = vcmp.eq.s32.totalorder %v43, %v53
    %v55 = vsel %vm54, 1, 0
    %v56 = vcvt.s32.f32 %v55
    %v57 = vadd.f32 %v50, %v56
    %58 = vset.pattern.permute.xlu0 2
    %59 = vperm.xlu0 %58, %v44
    %v60 = vpop.permute.xlu0 %59
    %vm61 = vcmp.eq.s32.totalorder %v43, %v60
    %v62 = vsel %vm61, 1, 0
    %v63 = vcvt.s32.f32 %v62
    %v64 = vadd.f32 %v57, %v63
    %65 = vset.pattern.permute.xlu0 3
    %66 = vperm.xlu0 %65, %v44
    %v67 = vpop.permute.xlu0 %66
    %vm68 = vcmp.eq.s32.totalorder %v43, %v67
    %v69 = vsel %vm68, 1, 0
    %v70 = vcvt.s32.f32 %v69
    %v71 = vadd.f32 %v64, %v70
    %v72 = vld [vmem:[%s0] sm:$0xff]
    %74 = vrot.lane.b32.xlu0 %v71, 16
    %v75 = vpop.permute.xlu0 %74
    %vm77 = vcmask 130048
    %v78 = vsel %vm77, %v72, %v75
    %v79 = vld [vmem:[%s3] sm:$0xff]
    %v80 = vld [vmem:[%s3 + $0x8] sm:$0xff]
    %v81 = vld [vmem:[%s3 + $0x10] sm:$0xff]
    %v82 = vld [vmem:[%s3 + $0x18] sm:$0xff]
    %v83 = vld [vmem:[%s3 + $0x20] sm:$0xff]
    %v84 = vld [vmem:[%s3 + $0x28] sm:$0xff]
    %v85 = vld [vmem:[%s3 + $0x30] sm:$0xff]
    %v86 = vld [vmem:[%s4] sm:$0x1]
    %v88 = vlaneseq
    %v89 = vshrl.u32 %v88, 7
    %v90 = vsub.s32 0, %v89
    %v91 = vrot.slane %v86, %v90
    %vm93 = vcmask 457728
    %v95 = vsel %vm93, %v78, 0
    %97 = vmatprep.subr.mxu0 0.0
    %98 = vmatpush1.msra.mxu0 %v79
    %99 = vmatprep.subr.mxu0 0.0
    %100 = vmatpush1.msra.mxu0 %v80
    %101 = vmatprep.subr.mxu0 0.0
    %102 = vmatpush1.msra.mxu0 %v81
    %103 = vmatprep.subr.mxu0 0.0
    %104 = vmatpush1.msra.mxu0 %v82
    %105 = vmatprep.subr.mxu0 0.0
    %106 = vmatpush1.msra.mxu0 %v83
    %107 = vmatprep.subr.mxu0 0.0
    %108 = vmatpush1.msra.mxu0 %v84
    %109 = vmatprep.subr.mxu0 0.0
    %110 = vmatpush1.msra.mxu0 %v85
    %111 = vmatprep.subr.mxu0 0.0
    %112 = vmatpush1.msra.mxu0 0.0
    %113 = vmatprep.subr.mxu0 0.0
    %114 = vmatpush1.msra.mxu0 0.0
    %115 = vmatprep.subr.mxu0 0.0
    %116 = vmatpush1.msra.mxu0 0.0
    %117 = vmatprep.subr.mxu0 0.0
    %118 = vmatpush1.msra.mxu0 0.0
    %119 = vmatprep.subr.mxu0 0.0
    %120 = vmatpush1.msra.mxu0 0.0
    %121 = vmatprep.subr.mxu0 0.0
    %122 = vmatpush1.msra.mxu0 0.0
    %123 = vmatprep.subr.mxu0 0.0
    %124 = vmatpush1.msra.mxu0 0.0
    %125 = vmatprep.subr.mxu0 0.0
    %126 = vmatpush1.msra.mxu0 0.0
    %127 = vmatprep.subr.mxu0 0.0
    %128 = vmatpush1.msra.mxu0 0.0
    %129 = vmatprep.subr.mxu0 0.0
    %130 = vmatpush1.msra.mxu0 0.0
    %131 = vmatprep.subr.mxu0 0.0
    %132 = vmatpush1.msra.mxu0 0.0
    %133 = vmatprep.subr.mxu0 0.0
    %134 = vmatpush1.msra.mxu0 0.0
    %135 = vmatprep.subr.mxu0 0.0
    %136 = vmatpush1.msra.mxu0 0.0
    %137 = vmatprep.subr.mxu0 0.0
    %138 = vmatpush1.msra.mxu0 0.0
    %139 = vmatprep.subr.mxu0 0.0
    %140 = vmatpush1.msra.mxu0 0.0
    %141 = vmatprep.subr.mxu0 0.0
    %142 = vmatpush1.msra.mxu0 0.0
    %143 = vmatprep.subr.mxu0 0.0
    %144 = vmatpush1.msra.mxu0 0.0
    %145 = vmatprep.subr.mxu0 0.0
    %146 = vmatpush1.msra.mxu0 0.0
    %147 = vmatprep.subr.mxu0 0.0
    %148 = vmatpush1.msra.mxu0 0.0
    %149 = vmatprep.subr.mxu0 0.0
    %150 = vmatpush1.msra.mxu0 0.0
    %151 = vmatprep.subr.mxu0 0.0
    %152 = vmatpush1.msra.mxu0 0.0
    %153 = vmatprep.subr.mxu0 0.0
    %154 = vmatpush1.msra.mxu0 0.0
    %155 = vmatprep.subr.mxu0 0.0
    %156 = vmatpush1.msra.mxu0 0.0
    %157 = vmatprep.subr.mxu0 0.0
    %158 = vmatpush1.msra.mxu0 0.0
    %159 = vmatprep.subr.mxu0 0.0
    %160 = vmatpush1.msra.mxu0 0.0
    %161 = vmatprep.mubr.f32.mxu0 0.0
    %162 = vmatmul.mubr.f32.gmra.mrb[0].mxu0 %v95
    %v163 = vpop.f32.mrb[0].mxu0
    %v164 = vadd.f32 %v91, %v163
    %v165 = vpop.f32.mrb[0].mxu0
    %166 = vdwg.mxu0
    %v167 = vmax.f32 %v164, 0.0
    %v168 = vmul.f32 %v164, %v164
    %170 = vrot.lane.b32.xlu0 %v168, 64
    %v171 = vpop.permute.xlu0 %170
    %vm173 = vcmask 31744
    %v174 = vsel %vm173, %v171, 0.0
    %175 = vadd.xlane.f32.xlu0 %v174
    %v176 = vpop.xlane.xlu0 %175
    %v177 = vmul.f32 %v176, 0.5
    %v178 = vadd.f32 %v164, %v177
    %180 = vrot.lane.b32.xlu0 %v167, 123
    %v181 = vpop.permute.xlu0 %180
    %vm183 = vcmask 523264
    %v184 = vsel %vm183, %v167, %v181
    %v185 = vld [vmem:[%s5] sm:$0xff]
    %v186 = vld [vmem:[%s5 + $0x8] sm:$0xff]
    %v187 = vld [vmem:[%s5 + $0x10] sm:$0xff]
    %v188 = vld [vmem:[%s5 + $0x18] sm:$0xff]
    %v189 = vld [vmem:[%s5 + $0x20] sm:$0xff]
    %v190 = vld [vmem:[%s5 + $0x28] sm:$0xff]
    %v191 = vld [vmem:[%s5 + $0x30] sm:$0xff]
    %v192 = vld [vmem:[%s5 + $0x38] sm:$0xff]
    %v193 = vld [vmem:[%s5 + $0x40] sm:$0xff]
    %v194 = vld [vmem:[%s5 + $0x48] sm:$0xff]
    %v195 = vld [vmem:[%s5 + $0x50] sm:$0xff]
    %v196 = vld [vmem:[%s5 + $0x58] sm:$0xff]
    %v197 = vld [vmem:[%s6] sm:$0x1]
    %v199 = vlaneseq
    %v200 = vshrl.u32 %v199, 7
    %v201 = vsub.s32 0, %v200
    %v202 = vrot.slane %v197, %v201
    %vm204 = vcmask 785408
    %v206 = vsel %vm204, %v184, 0
    %208 = vmatprep.subr.mxu0 0.0
    %209 = vmatpush1.msra.mxu0 %v185
    %210 = vmatprep.subr.mxu0 0.0
    %211 = vmatpush1.msra.mxu0 %v186
    %212 = vmatprep.subr.mxu0 0.0
    %213 = vmatpush1.msra.mxu0 %v187
    %214 = vmatprep.subr.mxu0 0.0
    %215 = vmatpush1.msra.mxu0 %v188
    %216 = vmatprep.subr.mxu0 0.0
    %217 = vmatpush1.msra.mxu0 %v189
    %218 = vmatprep.subr.mxu0 0.0
    %219 = vmatpush1.msra.mxu0 %v190
    %220 = vmatprep.subr.mxu0 0.0
    %221 = vmatpush1.msra.mxu0 %v191
    %222 = vmatprep.subr.mxu0 0.0
    %223 = vmatpush1.msra.mxu0 %v192
    %224 = vmatprep.subr.mxu0 0.0
    %225 = vmatpush1.msra.mxu0 %v193
    %226 = vmatprep.subr.mxu0 0.0
    %227 = vmatpush1.msra.mxu0 %v194
    %228 = vmatprep.subr.mxu0 0.0
    %229 = vmatpush1.msra.mxu0 %v195
    %230 = vmatprep.subr.mxu0 0.0
    %231 = vmatpush1.msra.mxu0 %v196
    %232 = vmatprep.subr.mxu0 0.0
    %233 = vmatpush1.msra.mxu0 0.0
    %234 = vmatprep.subr.mxu0 0.0
    %235 = vmatpush1.msra.mxu0 0.0
    %236 = vmatprep.subr.mxu0 0.0
    %237 = vmatpush1.msra.mxu0 0.0
    %238 = vmatprep.subr.mxu0 0.0
    %239 = vmatpush1.msra.mxu0 0.0
    %240 = vmatprep.subr.mxu0 0.0
    %241 = vmatpush1.msra.mxu0 0.0
    %242 = vmatprep.subr.mxu0 0.0
    %243 = vmatpush1.msra.mxu0 0.0
    %244 = vmatprep.subr.mxu0 0.0
    %245 = vmatpush1.msra.mxu0 0.0
    %246 = vmatprep.subr.mxu0 0.0
    %247 = vmatpush1.msra.mxu0 0.0
    %248 = vmatprep.subr.mxu0 0.0
    %249 = vmatpush1.msra.mxu0 0.0
    %250 = vmatprep.subr.mxu0 0.0
    %251 = vmatpush1.msra.mxu0 0.0
    %252 = vmatprep.subr.mxu0 0.0
    %253 = vmatpush1.msra.mxu0 0.0
    %254 = vmatprep.subr.mxu0 0.0
    %255 = vmatpush1.msra.mxu0 0.0
    %256 = vmatprep.subr.mxu0 0.0
    %257 = vmatpush1.msra.mxu0 0.0
    %258 = vmatprep.subr.mxu0 0.0
    %259 = vmatpush1.msra.mxu0 0.0
    %260 = vmatprep.subr.mxu0 0.0
    %261 = vmatpush1.msra.mxu0 0.0
    %262 = vmatprep.subr.mxu0 0.0
    %263 = vmatpush1.msra.mxu0 0.0
    %264 = vmatprep.subr.mxu0 0.0
    %265 = vmatpush1.msra.mxu0 0.0
    %266 = vmatprep.subr.mxu0 0.0
    %267 = vmatpush1.msra.mxu0 0.0
    %268 = vmatprep.subr.mxu0 0.0
    %269 = vmatpush1.msra.mxu0 0.0
    %270 = vmatprep.subr.mxu0 0.0
    %271 = vmatpush1.msra.mxu0 0.0
    %272 = vmatprep.mubr.f32.mxu0 0.0
    %273 = vmatmul.mubr.f32.gmra.mrb[0].mxu0 %v206
    %v274 = vpop.f32.mrb[0].mxu0
    %v275 = vadd.f32 %v202, %v274
    %v276 = vpop.f32.mrb[0].mxu0
    %277 = vdwg.mxu0
    %v278 = vmax.f32 %v275, 0.0
    %280 = vrot.lane.b32.xlu0 %v278, 95
    %v281 = vpop.permute.xlu0 %280
    %vm283 = vcmask 261120
    %v284 = vsel %vm283, %v281, 0.0
    %285 = vadd.xlane.f32.xlu0 %v284
    %v286 = vpop.xlane.xlu0 %285
    %v287 = vadd.f32 %v178, %v286
    %v288 = vstv %s41
    %v289 = vadd.f32 %v287, %v288
    %v290 = vstv %s40
    %v291 = vmul.f32 %v290, %v289
    %293 = vrot.lane.b32.xlu0 %v291, 92
    %v294 = vpop.permute.xlu0 %293
    %v296 = vadd.f32 %v275, %v294
    %v297 = vsel %vm283, %v275, %v296
    %vm298 = vcmask 269312
    %299 = vst.msk [vmem:[#allocation5] sm:$0xff] %vm298, %v297
    // Predicated region
    $region34: #{tpu_custom_call.1} parent=1 // pred_check
      _
    $region35: #{tpu_custom_call.1} parent=1 // pred_check_branch
      %301 = sbr.rel (0) target = $region37
    $region36: #{tpu_custom_call.1} parent=1 // pred_region
      %s303 = ssub.s32 128, 128
      %304 = vsyncadd [#allocation3], %s303
      %s306 = sshll.u32 [#allocation5], 4
      %s307 = int_to_ptr.vmem [resolvable:$true] %s306
      %309 = dma.vmem_to_hbm [thread:$0]  %s307, 128, %s7, [#allocation3]
    $region37: #{tpu_custom_call.1} parent=1 // pred_fallthru
      _
    // Predicated region
    $region38: #{tpu_custom_call.1} parent=1 // pred_check
      _
    $region39: #{tpu_custom_call.1} parent=1 // pred_check_branch
      %311 = sbr.rel (0) target = $region41
    $region40: #{tpu_custom_call.1} parent=1 // pred_region
      %312 = dma.done [#allocation3], 128
    $region41: #{tpu_custom_call.1} parent=1 // pred_fallthru
      _
    %313 = vsyncpa [#allocation3], 1
    %314 = vsyncpa [#allocation4], 1

</llo_original>
